<compile_context>
chip_gen: v7x
topology: tpu7x:2x2x1
jax: 0.10.0
libtpu: 0.0.40
codegen_flags: <defaults>
</compile_context>

<pallas_src>
import jax
import jax.numpy as jnp
from jax.experimental import pallas as pl
from jax.experimental.pallas import tpu as pltpu


OUT_PAD = 8      # narrow, f32 output; real logits are the first 5 columns
ROW_ALIGN = 16   # bf16 packs two rows per sublane -> align batch to 16


# -------------------------- Pallas kernel ------------------------------------
def mlp_kernel(x_ref,
               w0_ref, b0_ref,
               w1_ref, b1_ref,
               w2_ref, b2_ref,
               w35_ref, b35_ref,
               o_ref):
    # x arrives in f32; cast to the weight dtype on the VPU (free in this
    # memory-bound regime).  All matmuls accumulate in f32 on the MXU; bias
    # add + ReLU happen in f32 on the VPU.
    x = x_ref[...].astype(w0_ref.dtype)

    h = jnp.dot(x, w0_ref[...], preferred_element_type=jnp.float32)
    h = jnp.maximum(h + b0_ref[...], 0.0)

    h = jnp.dot(h.astype(w1_ref.dtype), w1_ref[...],
                preferred_element_type=jnp.float32)
    h = jnp.maximum(h + b1_ref[...], 0.0)

    h = jnp.dot(h.astype(w2_ref.dtype), w2_ref[...],
                preferred_element_type=jnp.float32)
    h = jnp.maximum(h + b2_ref[...], 0.0)

    # Fused E[3] + C : 128 -> 8 (only the first 5 output columns are real)
    z = jnp.dot(h.astype(w35_ref.dtype), w35_ref[...],
                preferred_element_type=jnp.float32)
    o_ref[...] = (z + b35_ref[...]).astype(o_ref.dtype)


# -------------------------- wrapper ------------------------------------------
def net_forward(x, params, *, bm=2048, compute_dtype=jnp.bfloat16):
    """x: (B, 187) float32.  params: dict of (in,out) weights and (1,out) biases.

    Returns (B, 5) float32 logits, numerically equivalent to the PyTorch
    forward (up to compute_dtype precision).
    """
    B, D_in = x.shape
    D_hidden = params["w0"].shape[1]
    D_out = params["wc"].shape[1]      # 5

    # --- fuse E[3] (128->32) and C (32->5) into one 128->5 layer (f32 math) ---
    w35 = params["w3"] @ params["wc"]                    # (128, 5)
    b35 = params["b3"] @ params["wc"] + params["bc"]     # (1, 5)

    # --- narrow output: pad classifier columns only to 8 ---
    w35p = jnp.zeros((D_hidden, OUT_PAD), jnp.float32).at[:, :D_out].set(w35)
    b35p = jnp.zeros((1, OUT_PAD), jnp.float32).at[:, :D_out].set(b35)

    # --- batch: pad only to the next multiple of 16 rows (never to full bm) ---
    B_pad = ((B + ROW_ALIGN - 1) // ROW_ALIGN) * ROW_ALIGN
    if B_pad != B:
        x = jnp.pad(x, ((0, B_pad - B), (0, 0)))

    # --- tile selection ---
    #  * small batch: single tile of exactly B_pad rows
    #  * medium batch (>=512, <=bm): split into 2 tiles so v7x's two
    #    TensorCores both get work under dimension_semantics=("parallel",)
    #  * large batch: bm-row tiles, ragged last tile handled by Pallas masking
    if B_pad <= bm:
        if B_pad >= 512:
            half = (B_pad + 1) // 2
            bm_eff = ((half + ROW_ALIGN - 1) // ROW_ALIGN) * ROW_ALIGN
        else:
            bm_eff = B_pad
    else:
        bm_eff = bm
    n_tiles = pl.cdiv(B_pad, bm_eff)

    # --- dtype handling: bf16 (or f32) weights, f32 accumulation / bias / ReLU
    cd = compute_dtype
    w0 = params["w0"].astype(cd)
    w1 = params["w1"].astype(cd)
    w2 = params["w2"].astype(cd)
    w35c = w35p.astype(cd)
    b0, b1, b2 = params["b0"], params["b1"], params["b2"]   # keep f32

    def full_spec(shape):
        nd = len(shape)
        return pl.BlockSpec(shape, lambda i, _nd=nd: (0,) * _nd)

    weight_args = (w0, b0, w1, b1, w2, b2, w35c, b35p)
    flops = 2 * B_pad * (D_in * D_hidden + 2 * D_hidden * D_hidden
                         + D_hidden * OUT_PAD)
    bytes_accessed = (x.size * x.dtype.itemsize
                      + sum(a.size * a.dtype.itemsize for a in weight_args)
                      + B_pad * OUT_PAD * 4)

    out = pl.pallas_call(
        mlp_kernel,
        out_shape=jax.ShapeDtypeStruct((B_pad, OUT_PAD), jnp.float32),
        grid_spec=pl.GridSpec(
            grid=(n_tiles,),
            in_specs=[
                pl.BlockSpec((bm_eff, D_in), lambda i: (i, 0)),   # x tile (f32)
                full_spec(w0.shape), full_spec(b0.shape),
                full_spec(w1.shape), full_spec(b1.shape),
                full_spec(w2.shape), full_spec(b2.shape),
                full_spec(w35c.shape), full_spec(b35p.shape),
            ],
            out_specs=pl.BlockSpec((bm_eff, OUT_PAD), lambda i: (i, 0)),
        ),
        compiler_params=pltpu.CompilerParams(
            dimension_semantics=("parallel",),
        ),
        cost_estimate=pl.CostEstimate(
            flops=flops, transcendentals=0, bytes_accessed=bytes_accessed),
    )(x, *weight_args)

    return out[:B, :D_out]


# -------------------------- parameter init -----------------------------------
def init_params(key, num=128):
    """Deterministic parameter init (PyTorch-style uniform fan-in bound)."""
    dims = [(187, num), (num, num), (num, num), (num, 32), (32, 5)]
    names = ["0", "1", "2", "3", "c"]
    params = {}
    for (fan_in, fan_out), name in zip(dims, names):
        key, kw, kb = jax.random.split(key, 3)
        bound = 1.0 / jnp.sqrt(fan_in)
        params[f"w{name}"] = jax.random.uniform(
            kw, (fan_in, fan_out), jnp.float32, -bound, bound)
        params[f"b{name}"] = jax.random.uniform(
            kb, (1, fan_out), jnp.float32, -bound, bound)
    return params


# -------------------------- pure-JAX reference --------------------------------
def net_forward_ref(x, params):
    h = jnp.maximum(x @ params["w0"] + params["b0"], 0.0)
    h = jnp.maximum(h @ params["w1"] + params["b1"], 0.0)
    h = jnp.maximum(h @ params["w2"] + params["b2"], 0.0)
    h = h @ params["w3"] + params["b3"]
    return h @ params["wc"] + params["bc"]


if __name__ == "__main__":
    key = jax.random.PRNGKey(0)
    k_param, k_x = jax.random.split(key)

    params = init_params(k_param, num=128)

    # Small demo batch (single grid step, no padding).
    batch = 16
    x = jax.random.normal(k_x, (batch, 187), jnp.float32)
    z_ref = net_forward_ref(x, params)

    # f32 compute path: should match the reference tightly.
    z_f32 = jax.block_until_ready(
        net_forward(x, params, compute_dtype=jnp.float32))
    assert z_f32.shape == (batch, 5)
    assert jnp.allclose(z_f32, z_ref, atol=1e-3, rtol=1e-3), "f32 mismatch"

    # bf16 compute path (recommended on v6e/v7x): looser tolerance.
    z_bf16 = jax.block_until_ready(
        net_forward(x, params, compute_dtype=jnp.bfloat16))
    assert z_bf16.shape == (batch, 5)
    assert jnp.allclose(z_bf16, z_ref, atol=5e-2, rtol=5e-2), "bf16 mismatch"

    # Non-multiple-of-16 batch exercises the small (16-row) padding path.
    x13 = jax.random.normal(jax.random.PRNGKey(3), (13, 187), jnp.float32)
    z13 = jax.block_until_ready(
        net_forward(x13, params, compute_dtype=jnp.float32))
    assert z13.shape == (13, 5)
    assert jnp.allclose(z13, net_forward_ref(x13, params),
                        atol=1e-3, rtol=1e-3), "padded-batch mismatch"

    # Multi-tile path with a ragged last tile (B=555 -> B_pad=560, bm=256
    # gives 3 grid steps, last tile only 48 real rows).
    x555 = jax.random.normal(jax.random.PRNGKey(7), (555, 187), jnp.float32)
    z555 = jax.block_until_ready(
        net_forward(x555, params, bm=256, compute_dtype=jnp.float32))
    assert z555.shape == (555, 5)
    assert jnp.allclose(z555, net_forward_ref(x555, params),
                        atol=1e-3, rtol=1e-3), "multi-tile mismatch"

    print("KERNEL_OK")
</pallas_src>

<mosaic_0001>
module attributes {stable_mosaic.version = 11 : i64} {
  func.func @mlp_kernel(%arg0: i32, %arg1: memref<16x187xf32, #tpu.memory_space<vmem>>, %arg2: memref<187x128xf32, #tpu.memory_space<vmem>>, %arg3: memref<1x128xf32, #tpu.memory_space<vmem>>, %arg4: memref<128x128xf32, #tpu.memory_space<vmem>>, %arg5: memref<1x128xf32, #tpu.memory_space<vmem>>, %arg6: memref<128x128xf32, #tpu.memory_space<vmem>>, %arg7: memref<1x128xf32, #tpu.memory_space<vmem>>, %arg8: memref<128x8xf32, #tpu.memory_space<vmem>>, %arg9: memref<1x8xf32, #tpu.memory_space<vmem>>, %arg10: memref<16x8xf32, #tpu.memory_space<vmem>>) attributes {dimension_semantics = [#tpu.dimension_semantics<parallel>], iteration_bounds = array<i64: 1>, scalar_prefetch = 0 : i64, scratch_operands = 0 : i64, tpu.core_type = #tpu.core_type<tc>, window_params = [{transform_indices = @transform_0, window_bounds = array<i64: 16, 187>}, {pipeline_mode = #tpu.pipeline_mode<synchronous>, transform_indices = @transform_1, window_bounds = array<i64: 187, 128>}, {pipeline_mode = #tpu.pipeline_mode<synchronous>, transform_indices = @transform_2, window_bounds = array<i64: 1, 128>}, {pipeline_mode = #tpu.pipeline_mode<synchronous>, transform_indices = @transform_3, window_bounds = array<i64: 128, 128>}, {pipeline_mode = #tpu.pipeline_mode<synchronous>, transform_indices = @transform_4, window_bounds = array<i64: 1, 128>}, {pipeline_mode = #tpu.pipeline_mode<synchronous>, transform_indices = @transform_5, window_bounds = array<i64: 128, 128>}, {pipeline_mode = #tpu.pipeline_mode<synchronous>, transform_indices = @transform_6, window_bounds = array<i64: 1, 128>}, {pipeline_mode = #tpu.pipeline_mode<synchronous>, transform_indices = @transform_7, window_bounds = array<i64: 128, 8>}, {pipeline_mode = #tpu.pipeline_mode<synchronous>, transform_indices = @transform_8, window_bounds = array<i64: 1, 8>}, {transform_indices = @transform_9, window_bounds = array<i64: 16, 8>}]} {
    %c0 = arith.constant 0 : index
    %c0_0 = arith.constant 0 : index
    %0 = vector.load %arg1[%c0, %c0_0] : memref<16x187xf32, #tpu.memory_space<vmem>>, vector<16x187xf32>
    %c0_1 = arith.constant 0 : index
    %c0_2 = arith.constant 0 : index
    %1 = vector.load %arg2[%c0_1, %c0_2] : memref<187x128xf32, #tpu.memory_space<vmem>>, vector<187x128xf32>
    %cst = arith.constant dense<0.000000e+00> : vector<16x128xf32>
    %2 = tpu.matmul %0, %1, %cst {dimension_numbers = #tpu.dot_dimension_numbers<[1], [0], [0], [1], [0, 0, 1, 1], [], []>} : vector<16x187xf32>, vector<187x128xf32>, vector<16x128xf32> -> vector<16x128xf32>
    %c0_3 = arith.constant 0 : index
    %c0_4 = arith.constant 0 : index
    %3 = vector.load %arg3[%c0_3, %c0_4] : memref<1x128xf32, #tpu.memory_space<vmem>>, vector<1x128xf32>
    %4 = vector.broadcast %3 : vector<1x128xf32> to vector<16x128xf32>
    %5 = arith.addf %2, %4 : vector<16x128xf32>
    %cst_5 = arith.constant 0.000000e+00 : f32
    %6 = vector.broadcast %cst_5 : f32 to vector<16x128xf32>
    %7 = arith.maximumf %5, %6 : vector<16x128xf32>
    %c0_6 = arith.constant 0 : index
    %c0_7 = arith.constant 0 : index
    %8 = vector.load %arg4[%c0_6, %c0_7] : memref<128x128xf32, #tpu.memory_space<vmem>>, vector<128x128xf32>
    %cst_8 = arith.constant dense<0.000000e+00> : vector<16x128xf32>
    %9 = tpu.matmul %7, %8, %cst_8 {dimension_numbers = #tpu.dot_dimension_numbers<[1], [0], [0], [1], [0, 0, 1, 1], [], []>} : vector<16x128xf32>, vector<128x128xf32>, vector<16x128xf32> -> vector<16x128xf32>
    %c0_9 = arith.constant 0 : index
    %c0_10 = arith.constant 0 : index
    %10 = vector.load %arg5[%c0_9, %c0_10] : memref<1x128xf32, #tpu.memory_space<vmem>>, vector<1x128xf32>
    %11 = vector.broadcast %10 : vector<1x128xf32> to vector<16x128xf32>
    %12 = arith.addf %9, %11 : vector<16x128xf32>
    %cst_11 = arith.constant 0.000000e+00 : f32
    %13 = vector.broadcast %cst_11 : f32 to vector<16x128xf32>
    %14 = arith.maximumf %12, %13 : vector<16x128xf32>
    %c0_12 = arith.constant 0 : index
    %c0_13 = arith.constant 0 : index
    %15 = vector.load %arg6[%c0_12, %c0_13] : memref<128x128xf32, #tpu.memory_space<vmem>>, vector<128x128xf32>
    %cst_14 = arith.constant dense<0.000000e+00> : vector<16x128xf32>
    %16 = tpu.matmul %14, %15, %cst_14 {dimension_numbers = #tpu.dot_dimension_numbers<[1], [0], [0], [1], [0, 0, 1, 1], [], []>} : vector<16x128xf32>, vector<128x128xf32>, vector<16x128xf32> -> vector<16x128xf32>
    %c0_15 = arith.constant 0 : index
    %c0_16 = arith.constant 0 : index
    %17 = vector.load %arg7[%c0_15, %c0_16] : memref<1x128xf32, #tpu.memory_space<vmem>>, vector<1x128xf32>
    %18 = vector.broadcast %17 : vector<1x128xf32> to vector<16x128xf32>
    %19 = arith.addf %16, %18 : vector<16x128xf32>
    %cst_17 = arith.constant 0.000000e+00 : f32
    %20 = vector.broadcast %cst_17 : f32 to vector<16x128xf32>
    %21 = arith.maximumf %19, %20 : vector<16x128xf32>
    %c0_18 = arith.constant 0 : index
    %c0_19 = arith.constant 0 : index
    %22 = vector.load %arg8[%c0_18, %c0_19] : memref<128x8xf32, #tpu.memory_space<vmem>>, vector<128x8xf32>
    %cst_20 = arith.constant dense<0.000000e+00> : vector<16x8xf32>
    %23 = tpu.matmul %21, %22, %cst_20 {dimension_numbers = #tpu.dot_dimension_numbers<[1], [0], [0], [1], [0, 0, 1, 1], [], []>} : vector<16x128xf32>, vector<128x8xf32>, vector<16x8xf32> -> vector<16x8xf32>
    %c0_21 = arith.constant 0 : index
    %c0_22 = arith.constant 0 : index
    %24 = vector.load %arg9[%c0_21, %c0_22] : memref<1x8xf32, #tpu.memory_space<vmem>>, vector<1x8xf32>
    %25 = vector.broadcast %24 : vector<1x8xf32> to vector<16x8xf32>
    %26 = arith.addf %23, %25 : vector<16x8xf32>
    %c0_23 = arith.constant 0 : index
    %c0_24 = arith.constant 0 : index
    %27 = vector.load %arg10[%c0_23, %c0_24] : memref<16x8xf32, #tpu.memory_space<vmem>>, vector<16x8xf32>
    tpu.vector_store %arg10[%c0_23, %c0_24], %26 {strides = array<i32>} : memref<16x8xf32, #tpu.memory_space<vmem>>, vector<16x8xf32>,
    return
  }
  func.func @transform_0(%arg0: i32) -> (i32, i32) {
    %c0_i32 = arith.constant 0 : i32
    %c0_i32_0 = arith.constant 0 : i32
    return %arg0, %c0_i32 : i32, i32
  }
  func.func @transform_1(%arg0: i32) -> (i32, i32) {
    %c0_i32 = arith.constant 0 : i32
    %c0_i32_0 = arith.constant 0 : i32
    %c0_i32_1 = arith.constant 0 : i32
    return %c0_i32, %c0_i32_0 : i32, i32
  }
  func.func @transform_2(%arg0: i32) -> (i32, i32) {
    %c0_i32 = arith.constant 0 : i32
    %c0_i32_0 = arith.constant 0 : i32
    %c0_i32_1 = arith.constant 0 : i32
    return %c0_i32, %c0_i32_0 : i32, i32
  }
  func.func @transform_3(%arg0: i32) -> (i32, i32) {
    %c0_i32 = arith.constant 0 : i32
    %c0_i32_0 = arith.constant 0 : i32
    %c0_i32_1 = arith.constant 0 : i32
    return %c0_i32, %c0_i32_0 : i32, i32
  }
  func.func @transform_4(%arg0: i32) -> (i32, i32) {
    %c0_i32 = arith.constant 0 : i32
    %c0_i32_0 = arith.constant 0 : i32
    %c0_i32_1 = arith.constant 0 : i32
    return %c0_i32, %c0_i32_0 : i32, i32
  }
  func.func @transform_5(%arg0: i32) -> (i32, i32) {
    %c0_i32 = arith.constant 0 : i32
    %c0_i32_0 = arith.constant 0 : i32
    %c0_i32_1 = arith.constant 0 : i32
    return %c0_i32, %c0_i32_0 : i32, i32
  }
  func.func @transform_6(%arg0: i32) -> (i32, i32) {
    %c0_i32 = arith.constant 0 : i32
    %c0_i32_0 = arith.constant 0 : i32
    %c0_i32_1 = arith.constant 0 : i32
    return %c0_i32, %c0_i32_0 : i32, i32
  }
  func.func @transform_7(%arg0: i32) -> (i32, i32) {
    %c0_i32 = arith.constant 0 : i32
    %c0_i32_0 = arith.constant 0 : i32
    %c0_i32_1 = arith.constant 0 : i32
    return %c0_i32, %c0_i32_0 : i32, i32
  }
  func.func @transform_8(%arg0: i32) -> (i32, i32) {
    %c0_i32 = arith.constant 0 : i32
    %c0_i32_0 = arith.constant 0 : i32
    %c0_i32_1 = arith.constant 0 : i32
    return %c0_i32, %c0_i32_0 : i32, i32
  }
  func.func @transform_9(%arg0: i32) -> (i32, i32) {
    %c0_i32 = arith.constant 0 : i32
    %c0_i32_0 = arith.constant 0 : i32
    return %arg0, %c0_i32 : i32, i32
  }
}

</mosaic_0001>

<llo_original>
// kernel: tpu_custom_call.1
$region0: #{tpu_custom_call.1}
  #allocation0 [shape = 'u32[]', space=smem, size = 0x4, offset = 0x4, fixed_abs, tag = 'smem constant byte address 0x4 - core index']
  #allocation1 [shape = 'u32[144,128]{1,0:T(1,128)}', space=vmem, size = 0x12000, scoped, tag = 'internal scratch']
  %s0 = inlined_call_operand.hbm [shape: f32[16,187], index: 0, kind: input, shape index: {}]
  %s1 = inlined_call_operand.hbm [shape: f32[187,128], index: 1, kind: input, shape index: {}]
  %s2 = inlined_call_operand.vmem [shape: f32[1,128], index: 2, kind: input, shape index: {}]
  %s3 = inlined_call_operand.vmem [shape: f32[128,128], index: 3, kind: input, shape index: {}]
  %s4 = inlined_call_operand.vmem [shape: f32[1,128], index: 4, kind: input, shape index: {}]
  %s5 = inlined_call_operand.hbm [shape: f32[128,128], index: 5, kind: input, shape index: {}]
  %s6 = inlined_call_operand.vmem [shape: f32[1,128], index: 6, kind: input, shape index: {}]
  %s7 = inlined_call_operand.vmem [shape: f32[128,8], index: 7, kind: input, shape index: {}]
  %s8 = inlined_call_operand.vmem [shape: f32[1,8], index: 8, kind: input, shape index: {}]
  %s9 = inlined_call_operand.vmem [shape: f32[16,8], index: 9, kind: output, shape index: {}]
  %s10 = sld [smem:[#allocation0]]
  $region58: #{tpu_custom_call.1} parent=0
    _
  %s12 = ssub.s32 1, %s10
  %s13 = scalar_select 0, %s12, %s10
  $region1: #{tpu_custom_call.1} parent=0
    #allocation2 [shape = 'u8[16384]{0}', space=vmem, size = 0x4000, scoped, tag = 'input window, operand 0, single buffered']
    #allocation3 [shape = 's32[1]{0}', space=sflag, size = 0x4, scoped, tag = 'scoped memory for tpu_custom_call.1']
    #allocation4 [shape = 'u8[98304]{0}', space=vmem, size = 0x18000, scoped, tag = 'input window, operand 1, single buffered']
    #allocation5 [shape = 's32[1]{0}', space=sflag, size = 0x4, scoped, tag = 'scoped memory for tpu_custom_call.1']
    #allocation6 [shape = 'u8[65536]{0}', space=vmem, size = 0x10000, scoped, tag = 'input window, operand 5, single buffered']
    %14 = vsyncpa [#allocation3], 0
    %15 = vsyncpa [#allocation5], 0
    // Predicated region
    $region2: #{tpu_custom_call.1} parent=1 // pred_check
      _
    $region3: #{tpu_custom_call.1} parent=1 // pred_check_branch
      %17 = sbr.rel (0) target = $region5
    $region4: #{tpu_custom_call.1} parent=1 // pred_region
      %s19 = ssub.s32 512, 512
      %20 = vsyncadd [#allocation3], %s19
      %s21 = sshll.u32 [#allocation2], 4
      %s22 = int_to_ptr.vmem [resolvable:$true] %s21
      %27 = dma.hbm_to_vmem [thread:$0]  %s0, 512, %s22, [#allocation3], 256, 256, 16
    $region5: #{tpu_custom_call.1} parent=1 // pred_fallthru
      _
    // Predicated region
    $region6: #{tpu_custom_call.1} parent=1 // pred_check
      _
    $region7: #{tpu_custom_call.1} parent=1 // pred_check_branch
      %29 = sbr.rel (0) target = $region9
    $region8: #{tpu_custom_call.1} parent=1 // pred_region
      %s31 = ssub.s32 3072, 3072
      %32 = vsyncadd [#allocation5], %s31
      %s33 = sshll.u32 [#allocation4], 4
      %s34 = int_to_ptr.vmem [resolvable:$true] %s33
      %39 = dma.hbm_to_vmem [thread:$0]  %s1, 3072, %s34, [#allocation5], 128, 128, 8
    $region9: #{tpu_custom_call.1} parent=1 // pred_fallthru
      _
    // Predicated region
    $region10: #{tpu_custom_call.1} parent=1 // pred_check
      _
    $region11: #{tpu_custom_call.1} parent=1 // pred_check_branch
      %41 = sbr.rel (0) target = $region13
    $region12: #{tpu_custom_call.1} parent=1 // pred_region
      _
    $region13: #{tpu_custom_call.1} parent=1 // pred_fallthru
      _
    // Predicated region
    $region14: #{tpu_custom_call.1} parent=1 // pred_check
      _
    $region15: #{tpu_custom_call.1} parent=1 // pred_check_branch
      %43 = sbr.rel (0) target = $region17
    $region16: #{tpu_custom_call.1} parent=1 // pred_region
      _
    $region17: #{tpu_custom_call.1} parent=1 // pred_fallthru
      _
    // Predicated region
    $region18: #{tpu_custom_call.1} parent=1 // pred_check
      _
    $region19: #{tpu_custom_call.1} parent=1 // pred_check_branch
      %45 = sbr.rel (0) target = $region21
    $region20: #{tpu_custom_call.1} parent=1 // pred_region
      _
    $region21: #{tpu_custom_call.1} parent=1 // pred_fallthru
      _
    // Predicated region
    $region22: #{tpu_custom_call.1} parent=1 // pred_check
      _
    $region23: #{tpu_custom_call.1} parent=1 // pred_check_branch
      %47 = sbr.rel (0) target = $region25
    $region24: #{tpu_custom_call.1} parent=1 // pred_region
      %s49 = ssub.s32 2048, 2048
      %50 = vsyncadd [#allocation5], %s49
      %s51 = sshll.u32 [#allocation6], 4
      %s52 = int_to_ptr.vmem [resolvable:$true] %s51
      %57 = dma.hbm_to_vmem [thread:$0]  %s5, 2048, %s52, [#allocation5], 128, 128, 8
    $region25: #{tpu_custom_call.1} parent=1 // pred_fallthru
      _
    // Predicated region
    $region26: #{tpu_custom_call.1} parent=1 // pred_check
      _
    $region27: #{tpu_custom_call.1} parent=1 // pred_check_branch
      %59 = sbr.rel (0) target = $region29
    $region28: #{tpu_custom_call.1} parent=1 // pred_region
      _
    $region29: #{tpu_custom_call.1} parent=1 // pred_fallthru
      _
    // Predicated region
    $region30: #{tpu_custom_call.1} parent=1 // pred_check
      _
    $region31: #{tpu_custom_call.1} parent=1 // pred_check_branch
      %61 = sbr.rel (0) target = $region33
    $region32: #{tpu_custom_call.1} parent=1 // pred_region
      _
    $region33: #{tpu_custom_call.1} parent=1 // pred_fallthru
      _
    // Predicated region
    $region34: #{tpu_custom_call.1} parent=1 // pred_check
      _
    $region35: #{tpu_custom_call.1} parent=1 // pred_check_branch
      %63 = sbr.rel (0) target = $region37
    $region36: #{tpu_custom_call.1} parent=1 // pred_region
      _
    $region37: #{tpu_custom_call.1} parent=1 // pred_fallthru
      _
    // Predicated region
    $region38: #{tpu_custom_call.1} parent=1 // pred_check
      _
    $region39: #{tpu_custom_call.1} parent=1 // pred_check_branch
      %65 = sbr.rel (0) target = $region41
    $region40: #{tpu_custom_call.1} parent=1 // pred_region
      %66 = dma.done [#allocation3], 512
    $region41: #{tpu_custom_call.1} parent=1 // pred_fallthru
      _
    // Predicated region
    $region42: #{tpu_custom_call.1} parent=1 // pred_check
      _
    $region43: #{tpu_custom_call.1} parent=1 // pred_check_branch
      %68 = sbr.rel (0) target = $region45
    $region44: #{tpu_custom_call.1} parent=1 // pred_region
      %69 = dma.done [#allocation5], 3072
    $region45: #{tpu_custom_call.1} parent=1 // pred_fallthru
      _
    // Predicated region
    $region46: #{tpu_custom_call.1} parent=1 // pred_check
      _
    $region47: #{tpu_custom_call.1} parent=1 // pred_check_branch
      %71 = sbr.rel (0) target = $region49
    $region48: #{tpu_custom_call.1} parent=1 // pred_region
      %72 = dma.done [#allocation5], 2048
    $region49: #{tpu_custom_call.1} parent=1 // pred_fallthru
      _
    %v73 = vld [vmem:[#allocation2] sm:$0xff]
    %v74 = vld [vmem:[#allocation2 + $0x8] sm:$0xff]
    %v75 = vld [vmem:[#allocation2 + $0x10] sm:$0xff]
    %v76 = vld [vmem:[#allocation2 + $0x18] sm:$0xff]
    %v77 = vld [vmem:[#allocation4] sm:$0xff]
    %v78 = vld [vmem:[#allocation4 + $0x8] sm:$0xff]
    %v79 = vld [vmem:[#allocation4 + $0x10] sm:$0xff]
    %v80 = vld [vmem:[#allocation4 + $0x18] sm:$0xff]
    %v81 = vld [vmem:[#allocation4 + $0x20] sm:$0xff]
    %v82 = vld [vmem:[#allocation4 + $0x28] sm:$0xff]
    %v83 = vld [vmem:[#allocation4 + $0x30] sm:$0xff]
    %v84 = vld [vmem:[#allocation4 + $0x38] sm:$0xff]
    %v85 = vld [vmem:[#allocation4 + $0x40] sm:$0xff]
    %v86 = vld [vmem:[#allocation4 + $0x48] sm:$0xff]
    %v87 = vld [vmem:[#allocation4 + $0x50] sm:$0xff]
    %v88 = vld [vmem:[#allocation4 + $0x58] sm:$0xff]
    %v89 = vld [vmem:[#allocation4 + $0x60] sm:$0xff]
    %v90 = vld [vmem:[#allocation4 + $0x68] sm:$0xff]
    %v91 = vld [vmem:[#allocation4 + $0x70] sm:$0xff]
    %v92 = vld [vmem:[#allocation4 + $0x78] sm:$0xff]
    %v93 = vld [vmem:[#allocation4 + $0x80] sm:$0xff]
    %v94 = vld [vmem:[#allocation4 + $0x88] sm:$0xff]
    %v95 = vld [vmem:[#allocation4 + $0x90] sm:$0xff]
    %v96 = vld [vmem:[#allocation4 + $0x98] sm:$0xff]
    %v97 = vld [vmem:[#allocation4 + $0xa0] sm:$0xff]
    %v98 = vld [vmem:[#allocation4 + $0xa8] sm:$0xff]
    %v99 = vld [vmem:[#allocation4 + $0xb0] sm:$0xff]
    %v100 = vld [vmem:[#allocation4 + $0xb8] sm:$0x7]
    %v101 = vld [vmem:[%s2] sm:$0x1]
    %v103 = vlaneseq
    %v104 = vshrl.u32 %v103, 7
    %v105 = vsub.s32 0, %v104
    %v106 = vrot.slane %v101, %v105
    %vm108 = vcmask 482304
    %v110 = vsel %vm108, %v74, 0
    %v113 = vsel %vm108, %v76, 0
    %vm115 = vcmask 1042432
    %v117 = vsel %vm115, %v100, 0
    %119 = vmatprep.subr.mxu0 0.0
    %120 = vmatpush1.msra.mxu0 %v77
    %121 = vmatprep.subr.mxu0 0.0
    %122 = vmatpush1.msra.mxu0 %v78
    %123 = vmatprep.subr.mxu0 0.0
    %124 = vmatpush1.msra.mxu0 %v79
    %125 = vmatprep.subr.mxu0 0.0
    %126 = vmatpush1.msra.mxu0 %v80
    %127 = vmatprep.subr.mxu0 0.0
    %128 = vmatpush1.msra.mxu0 %v81
    %129 = vmatprep.subr.mxu0 0.0
    %130 = vmatpush1.msra.mxu0 %v82
    %131 = vmatprep.subr.mxu0 0.0
    %132 = vmatpush1.msra.mxu0 %v83
    %133 = vmatprep.subr.mxu0 0.0
    %134 = vmatpush1.msra.mxu0 %v84
    %135 = vmatprep.subr.mxu0 0.0
    %136 = vmatpush1.msra.mxu0 %v85
    %137 = vmatprep.subr.mxu0 0.0
    %138 = vmatpush1.msra.mxu0 %v86
    %139 = vmatprep.subr.mxu0 0.0
    %140 = vmatpush1.msra.mxu0 %v87
    %141 = vmatprep.subr.mxu0 0.0
    %142 = vmatpush1.msra.mxu0 %v88
    %143 = vmatprep.subr.mxu0 0.0
    %144 = vmatpush1.msra.mxu0 %v89
    %145 = vmatprep.subr.mxu0 0.0
    %146 = vmatpush1.msra.mxu0 %v90
    %147 = vmatprep.subr.mxu0 0.0
    %148 = vmatpush1.msra.mxu0 %v91
    %149 = vmatprep.subr.mxu0 0.0
    %150 = vmatpush1.msra.mxu0 %v92
    %151 = vmatprep.subr.mxu0 0.0
    %152 = vmatpush1.msra.mxu0 %v93
    %153 = vmatprep.subr.mxu0 0.0
    %154 = vmatpush1.msra.mxu0 %v94
    %155 = vmatprep.subr.mxu0 0.0
    %156 = vmatpush1.msra.mxu0 %v95
    %157 = vmatprep.subr.mxu0 0.0
    %158 = vmatpush1.msra.mxu0 %v96
    %159 = vmatprep.subr.mxu0 0.0
    %160 = vmatpush1.msra.mxu0 %v97
    %161 = vmatprep.subr.mxu0 0.0
    %162 = vmatpush1.msra.mxu0 %v98
    %163 = vmatprep.subr.mxu0 0.0
    %164 = vmatpush1.msra.mxu0 %v99
    %165 = vmatprep.subr.mxu0 0.0
    %166 = vmatpush1.msra.mxu0 %v117
    %167 = vmatprep.subr.mxu0 0.0
    %168 = vmatpush1.msra.mxu0 0.0
    %169 = vmatprep.subr.mxu0 0.0
    %170 = vmatpush1.msra.mxu0 0.0
    %171 = vmatprep.subr.mxu0 0.0
    %172 = vmatpush1.msra.mxu0 0.0
    %173 = vmatprep.subr.mxu0 0.0
    %174 = vmatpush1.msra.mxu0 0.0
    %175 = vmatprep.subr.mxu0 0.0
    %176 = vmatpush1.msra.mxu0 0.0
    %177 = vmatprep.subr.mxu0 0.0
    %178 = vmatpush1.msra.mxu0 0.0
    %179 = vmatprep.subr.mxu0 0.0
    %180 = vmatpush1.msra.mxu0 0.0
    %181 = vmatprep.subr.mxu0 0.0
    %182 = vmatpush1.msra.mxu0 0.0
    %183 = vmatprep.mubr.f32.mxu0 %v110
    %184 = vmatmul.mubr.f32.gmra.mrb[0].mxu0 %v73
    %v185 = vpop.f32.mrb[0].mxu0
    %v186 = vadd.f32 %v106, %v185
    %v187 = vpop.f32.mrb[0].mxu0
    %188 = vmatprep.mubr.f32.mxu0 %v113
    %189 = vmatmul.mubr.f32.gmra.mrb[0].mxu0 %v75
    %v190 = vpop.f32.mrb[0].mxu0
    %v191 = vadd.f32 %v106, %v190
    %v192 = vpop.f32.mrb[0].mxu0
    %193 = vdwg.mxu0
    %v194 = vmax.f32 %v186, 0.0
    %v195 = vmax.f32 %v191, 0.0
    %v196 = vld [vmem:[%s3] sm:$0xff]
    %v197 = vld [vmem:[%s3 + $0x8] sm:$0xff]
    %v198 = vld [vmem:[%s3 + $0x10] sm:$0xff]
    %v199 = vld [vmem:[%s3 + $0x18] sm:$0xff]
    %v200 = vld [vmem:[%s3 + $0x20] sm:$0xff]
    %v201 = vld [vmem:[%s3 + $0x28] sm:$0xff]
    %v202 = vld [vmem:[%s3 + $0x30] sm:$0xff]
    %v203 = vld [vmem:[%s3 + $0x38] sm:$0xff]
    %v204 = vld [vmem:[%s3 + $0x40] sm:$0xff]
    %v205 = vld [vmem:[%s3 + $0x48] sm:$0xff]
    %v206 = vld [vmem:[%s3 + $0x50] sm:$0xff]
    %v207 = vld [vmem:[%s3 + $0x58] sm:$0xff]
    %v208 = vld [vmem:[%s3 + $0x60] sm:$0xff]
    %v209 = vld [vmem:[%s3 + $0x68] sm:$0xff]
    %v210 = vld [vmem:[%s3 + $0x70] sm:$0xff]
    %v211 = vld [vmem:[%s3 + $0x78] sm:$0xff]
    %v212 = vld [vmem:[%s4] sm:$0x1]
    %v214 = vlaneseq
    %v215 = vshrl.u32 %v214, 7
    %v216 = vsub.s32 0, %v215
    %v217 = vrot.slane %v212, %v216
    %219 = vmatprep.subr.mxu0 0.0
    %220 = vmatpush1.msra.mxu0 %v196
    %221 = vmatprep.subr.mxu0 0.0
    %222 = vmatpush1.msra.mxu0 %v197
    %223 = vmatprep.subr.mxu0 0.0
    %224 = vmatpush1.msra.mxu0 %v198
    %225 = vmatprep.subr.mxu0 0.0
    %226 = vmatpush1.msra.mxu0 %v199
    %227 = vmatprep.subr.mxu0 0.0
    %228 = vmatpush1.msra.mxu0 %v200
    %229 = vmatprep.subr.mxu0 0.0
    %230 = vmatpush1.msra.mxu0 %v201
    %231 = vmatprep.subr.mxu0 0.0
    %232 = vmatpush1.msra.mxu0 %v202
    %233 = vmatprep.subr.mxu0 0.0
    %234 = vmatpush1.msra.mxu0 %v203
    %235 = vmatprep.subr.mxu0 0.0
    %236 = vmatpush1.msra.mxu0 %v204
    %237 = vmatprep.subr.mxu0 0.0
    %238 = vmatpush1.msra.mxu0 %v205
    %239 = vmatprep.subr.mxu0 0.0
    %240 = vmatpush1.msra.mxu0 %v206
    %241 = vmatprep.subr.mxu0 0.0
    %242 = vmatpush1.msra.mxu0 %v207
    %243 = vmatprep.subr.mxu0 0.0
    %244 = vmatpush1.msra.mxu0 %v208
    %245 = vmatprep.subr.mxu0 0.0
    %246 = vmatpush1.msra.mxu0 %v209
    %247 = vmatprep.subr.mxu0 0.0
    %248 = vmatpush1.msra.mxu0 %v210
    %249 = vmatprep.subr.mxu0 0.0
    %250 = vmatpush1.msra.mxu0 %v211
    %251 = vmatprep.subr.mxu0 0.0
    %252 = vmatpush1.msra.mxu0 0.0
    %253 = vmatprep.subr.mxu0 0.0
    %254 = vmatpush1.msra.mxu0 0.0
    %255 = vmatprep.subr.mxu0 0.0
    %256 = vmatpush1.msra.mxu0 0.0
    %257 = vmatprep.subr.mxu0 0.0
    %258 = vmatpush1.msra.mxu0 0.0
    %259 = vmatprep.subr.mxu0 0.0
    %260 = vmatpush1.msra.mxu0 0.0
    %261 = vmatprep.subr.mxu0 0.0
    %262 = vmatpush1.msra.mxu0 0.0
    %263 = vmatprep.subr.mxu0 0.0
    %264 = vmatpush1.msra.mxu0 0.0
    %265 = vmatprep.subr.mxu0 0.0
    %266 = vmatpush1.msra.mxu0 0.0
    %267 = vmatprep.subr.mxu0 0.0
    %268 = vmatpush1.msra.mxu0 0.0
    %269 = vmatprep.subr.mxu0 0.0
    %270 = vmatpush1.msra.mxu0 0.0
    %271 = vmatprep.subr.mxu0 0.0
    %272 = vmatpush1.msra.mxu0 0.0
    %273 = vmatprep.subr.mxu0 0.0
    %274 = vmatpush1.msra.mxu0 0.0
    %275 = vmatprep.subr.mxu0 0.0
    %276 = vmatpush1.msra.mxu0 0.0
    %277 = vmatprep.subr.mxu0 0.0
    %278 = vmatpush1.msra.mxu0 0.0
    %279 = vmatprep.subr.mxu0 0.0
    %280 = vmatpush1.msra.mxu0 0.0
    %281 = vmatprep.subr.mxu0 0.0
    %282 = vmatpush1.msra.mxu0 0.0
    %283 = vmatprep.mubr.f32.mxu0 0.0
    %284 = vmatmul.mubr.f32.gmra.mrb[0].mxu0 %v194
    %v285 = vpop.f32.mrb[0].mxu0
    %v286 = vadd.f32 %v217, %v285
    %v287 = vpop.f32.mrb[0].mxu0
    %288 = vmatprep.mubr.f32.mxu0 0.0
    %289 = vmatmul.mubr.f32.gmra.mrb[0].mxu0 %v195
    %v290 = vpop.f32.mrb[0].mxu0
    %v291 = vadd.f32 %v217, %v290
    %v292 = vpop.f32.mrb[0].mxu0
    %293 = vdwg.mxu0
    %v294 = vmax.f32 %v286, 0.0
    %v295 = vmax.f32 %v291, 0.0
    %v296 = vld [vmem:[#allocation6] sm:$0xff]
    %v297 = vld [vmem:[#allocation6 + $0x8] sm:$0xff]
    %v298 = vld [vmem:[#allocation6 + $0x10] sm:$0xff]
    %v299 = vld [vmem:[#allocation6 + $0x18] sm:$0xff]
    %v300 = vld [vmem:[#allocation6 + $0x20] sm:$0xff]
    %v301 = vld [vmem:[#allocation6 + $0x28] sm:$0xff]
    %v302 = vld [vmem:[#allocation6 + $0x30] sm:$0xff]
    %v303 = vld [vmem:[#allocation6 + $0x38] sm:$0xff]
    %v304 = vld [vmem:[#allocation6 + $0x40] sm:$0xff]
    %v305 = vld [vmem:[#allocation6 + $0x48] sm:$0xff]
    %v306 = vld [vmem:[#allocation6 + $0x50] sm:$0xff]
    %v307 = vld [vmem:[#allocation6 + $0x58] sm:$0xff]
    %v308 = vld [vmem:[#allocation6 + $0x60] sm:$0xff]
    %v309 = vld [vmem:[#allocation6 + $0x68] sm:$0xff]
    %v310 = vld [vmem:[#allocation6 + $0x70] sm:$0xff]
    %v311 = vld [vmem:[#allocation6 + $0x78] sm:$0xff]
    %v312 = vld [vmem:[%s6] sm:$0x1]
    %v314 = vlaneseq
    %v315 = vshrl.u32 %v314, 7
    %v316 = vsub.s32 0, %v315
    %v317 = vrot.slane %v312, %v316
    %319 = vmatprep.subr.mxu0 0.0
    %320 = vmatpush1.msra.mxu0 %v296
    %321 = vmatprep.subr.mxu0 0.0
    %322 = vmatpush1.msra.mxu0 %v297
    %323 = vmatprep.subr.mxu0 0.0
    %324 = vmatpush1.msra.mxu0 %v298
    %325 = vmatprep.subr.mxu0 0.0
    %326 = vmatpush1.msra.mxu0 %v299
    %327 = vmatprep.subr.mxu0 0.0
    %328 = vmatpush1.msra.mxu0 %v300
    %329 = vmatprep.subr.mxu0 0.0
    %330 = vmatpush1.msra.mxu0 %v301
    %331 = vmatprep.subr.mxu0 0.0
    %332 = vmatpush1.msra.mxu0 %v302
    %333 = vmatprep.subr.mxu0 0.0
    %334 = vmatpush1.msra.mxu0 %v303
    %335 = vmatprep.subr.mxu0 0.0
    %336 = vmatpush1.msra.mxu0 %v304
    %337 = vmatprep.subr.mxu0 0.0
    %338 = vmatpush1.msra.mxu0 %v305
    %339 = vmatprep.subr.mxu0 0.0
    %340 = vmatpush1.msra.mxu0 %v306
    %341 = vmatprep.subr.mxu0 0.0
    %342 = vmatpush1.msra.mxu0 %v307
    %343 = vmatprep.subr.mxu0 0.0
    %344 = vmatpush1.msra.mxu0 %v308
    %345 = vmatprep.subr.mxu0 0.0
    %346 = vmatpush1.msra.mxu0 %v309
    %347 = vmatprep.subr.mxu0 0.0
    %348 = vmatpush1.msra.mxu0 %v310
    %349 = vmatprep.subr.mxu0 0.0
    %350 = vmatpush1.msra.mxu0 %v311
    %351 = vmatprep.subr.mxu0 0.0
    %352 = vmatpush1.msra.mxu0 0.0
    %353 = vmatprep.subr.mxu0 0.0
    %354 = vmatpush1.msra.mxu0 0.0
    %355 = vmatprep.subr.mxu0 0.0
    %356 = vmatpush1.msra.mxu0 0.0
    %357 = vmatprep.subr.mxu0 0.0
    %358 = vmatpush1.msra.mxu0 0.0
    %359 = vmatprep.subr.mxu0 0.0
    %360 = vmatpush1.msra.mxu0 0.0
    %361 = vmatprep.subr.mxu0 0.0
    %362 = vmatpush1.msra.mxu0 0.0
    %363 = vmatprep.subr.mxu0 0.0
    %364 = vmatpush1.msra.mxu0 0.0
    %365 = vmatprep.subr.mxu0 0.0
    %366 = vmatpush1.msra.mxu0 0.0
    %367 = vmatprep.subr.mxu0 0.0
    %368 = vmatpush1.msra.mxu0 0.0
    %369 = vmatprep.subr.mxu0 0.0
    %370 = vmatpush1.msra.mxu0 0.0
    %371 = vmatprep.subr.mxu0 0.0
    %372 = vmatpush1.msra.mxu0 0.0
    %373 = vmatprep.subr.mxu0 0.0
    %374 = vmatpush1.msra.mxu0 0.0
    %375 = vmatprep.subr.mxu0 0.0
    %376 = vmatpush1.msra.mxu0 0.0
    %377 = vmatprep.subr.mxu0 0.0
    %378 = vmatpush1.msra.mxu0 0.0
    %379 = vmatprep.subr.mxu0 0.0
    %380 = vmatpush1.msra.mxu0 0.0
    %381 = vmatprep.subr.mxu0 0.0
    %382 = vmatpush1.msra.mxu0 0.0
    %383 = vmatprep.mubr.f32.mxu0 0.0
    %384 = vmatmul.mubr.f32.gmra.mrb[0].mxu0 %v294
    %v385 = vpop.f32.mrb[0].mxu0
    %v386 = vadd.f32 %v317, %v385
    %v387 = vpop.f32.mrb[0].mxu0
    %388 = vmatprep.mubr.f32.mxu0 0.0
    %389 = vmatmul.mubr.f32.gmra.mrb[0].mxu0 %v295
    %v390 = vpop.f32.mrb[0].mxu0
    %v391 = vadd.f32 %v317, %v390
    %v392 = vpop.f32.mrb[0].mxu0
    %393 = vdwg.mxu0
    %v394 = vmax.f32 %v386, 0.0
    %v395 = vmax.f32 %v391, 0.0
    %v396 = vld [vmem:[%s7] sm:$0xff]
    %v397 = vld [vmem:[%s7 + $0x8] sm:$0xff]
    %v398 = vld [vmem:[%s7 + $0x10] sm:$0xff]
    %v399 = vld [vmem:[%s7 + $0x18] sm:$0xff]
    %v400 = vld [vmem:[%s7 + $0x20] sm:$0xff]
    %v401 = vld [vmem:[%s7 + $0x28] sm:$0xff]
    %v402 = vld [vmem:[%s7 + $0x30] sm:$0xff]
    %v403 = vld [vmem:[%s7 + $0x38] sm:$0xff]
    %v404 = vld [vmem:[%s7 + $0x40] sm:$0xff]
    %v405 = vld [vmem:[%s7 + $0x48] sm:$0xff]
    %v406 = vld [vmem:[%s7 + $0x50] sm:$0xff]
    %v407 = vld [vmem:[%s7 + $0x58] sm:$0xff]
    %v408 = vld [vmem:[%s7 + $0x60] sm:$0xff]
    %v409 = vld [vmem:[%s7 + $0x68] sm:$0xff]
    %v410 = vld [vmem:[%s7 + $0x70] sm:$0xff]
    %v411 = vld [vmem:[%s7 + $0x78] sm:$0xff]
    %v412 = vld [vmem:[%s8] sm:$0x1]
    %v414 = vlaneseq
    %v415 = vshrl.u32 %v414, 7
    %v416 = vsub.s32 0, %v415
    %v417 = vrot.slane %v412, %v416
    %419 = vmatprep.subr.mxu0 0.0
    %420 = vmatpush1.msra.mxu0 %v396
    %421 = vmatprep.subr.mxu0 0.0
    %422 = vmatpush1.msra.mxu0 %v397
    %423 = vmatprep.subr.mxu0 0.0
    %424 = vmatpush1.msra.mxu0 %v398
    %425 = vmatprep.subr.mxu0 0.0
    %426 = vmatpush1.msra.mxu0 %v399
    %427 = vmatprep.subr.mxu0 0.0
    %428 = vmatpush1.msra.mxu0 %v400
    %429 = vmatprep.subr.mxu0 0.0
    %430 = vmatpush1.msra.mxu0 %v401
    %431 = vmatprep.subr.mxu0 0.0
    %432 = vmatpush1.msra.mxu0 %v402
    %433 = vmatprep.subr.mxu0 0.0
    %434 = vmatpush1.msra.mxu0 %v403
    %435 = vmatprep.subr.mxu0 0.0
    %436 = vmatpush1.msra.mxu0 %v404
    %437 = vmatprep.subr.mxu0 0.0
    %438 = vmatpush1.msra.mxu0 %v405
    %439 = vmatprep.subr.mxu0 0.0
    %440 = vmatpush1.msra.mxu0 %v406
    %441 = vmatprep.subr.mxu0 0.0
    %442 = vmatpush1.msra.mxu0 %v407
    %443 = vmatprep.subr.mxu0 0.0
    %444 = vmatpush1.msra.mxu0 %v408
    %445 = vmatprep.subr.mxu0 0.0
    %446 = vmatpush1.msra.mxu0 %v409
    %447 = vmatprep.subr.mxu0 0.0
    %448 = vmatpush1.msra.mxu0 %v410
    %449 = vmatprep.subr.mxu0 0.0
    %450 = vmatpush1.msra.mxu0 %v411
    %451 = vmatprep.subr.mxu0 0.0
    %452 = vmatpush1.msra.mxu0 0.0
    %453 = vmatprep.subr.mxu0 0.0
    %454 = vmatpush1.msra.mxu0 0.0
    %455 = vmatprep.subr.mxu0 0.0
    %456 = vmatpush1.msra.mxu0 0.0
    %457 = vmatprep.subr.mxu0 0.0
    %458 = vmatpush1.msra.mxu0 0.0
    %459 = vmatprep.subr.mxu0 0.0
    %460 = vmatpush1.msra.mxu0 0.0
    %461 = vmatprep.subr.mxu0 0.0
    %462 = vmatpush1.msra.mxu0 0.0
    %463 = vmatprep.subr.mxu0 0.0
    %464 = vmatpush1.msra.mxu0 0.0
    %465 = vmatprep.subr.mxu0 0.0
    %466 = vmatpush1.msra.mxu0 0.0
    %467 = vmatprep.subr.mxu0 0.0
    %468 = vmatpush1.msra.mxu0 0.0
    %469 = vmatprep.subr.mxu0 0.0
    %470 = vmatpush1.msra.mxu0 0.0
    %471 = vmatprep.subr.mxu0 0.0
    %472 = vmatpush1.msra.mxu0 0.0
    %473 = vmatprep.subr.mxu0 0.0
    %474 = vmatpush1.msra.mxu0 0.0
    %475 = vmatprep.subr.mxu0 0.0
    %476 = vmatpush1.msra.mxu0 0.0
    %477 = vmatprep.subr.mxu0 0.0
    %478 = vmatpush1.msra.mxu0 0.0
    %479 = vmatprep.subr.mxu0 0.0
    %480 = vmatpush1.msra.mxu0 0.0
    %481 = vmatprep.subr.mxu0 0.0
    %482 = vmatpush1.msra.mxu0 0.0
    %483 = vmatprep.mubr.f32.mxu0 0.0
    %484 = vmatmul.mubr.f32.gmra.mrb[0].mxu0 %v394
    %v485 = vpop.f32.mrb[0].mxu0
    %v486 = vadd.f32 %v417, %v485
    %v487 = vpop.f32.mrb[0].mxu0
    %488 = vmatprep.mubr.f32.mxu0 0.0
    %489 = vmatmul.mubr.f32.gmra.mrb[0].mxu0 %v395
    %v490 = vpop.f32.mrb[0].mxu0
    %v491 = vadd.f32 %v417, %v490
    %v492 = vpop.f32.mrb[0].mxu0
    %493 = vdwg.mxu0
    %vm494 = vcmask 64512
    %495 = vst.msk [vmem:[%s9] sm:$0xff] %vm494, %v486
    %496 = vst.msk [vmem:[%s9 + $0x8] sm:$0xff] %vm494, %v491
    // Predicated region
    $region50: #{tpu_custom_call.1} parent=1 // pred_check
      _
    $region51: #{tpu_custom_call.1} parent=1 // pred_check_branch
      %498 = sbr.rel (0) target = $region53
    $region52: #{tpu_custom_call.1} parent=1 // pred_region
      _
    $region53: #{tpu_custom_call.1} parent=1 // pred_fallthru
      _
    // Predicated region
    $region54: #{tpu_custom_call.1} parent=1 // pred_check
      _
    $region55: #{tpu_custom_call.1} parent=1 // pred_check_branch
      %500 = sbr.rel (0) target = $region57
    $region56: #{tpu_custom_call.1} parent=1 // pred_region
      _
    $region57: #{tpu_custom_call.1} parent=1 // pred_fallthru
      _
    %501 = vsyncpa [#allocation3], 1
    %502 = vsyncpa [#allocation5], 1

</llo_original>
